<compile_context>
chip_gen: v7x
topology: tpu7x:2x2x1
jax: 0.10.0
libtpu: 0.0.40
codegen_flags: <defaults>
</compile_context>

<pallas_src>
import functools

import jax
import jax.numpy as jnp
from jax.experimental import pallas as pl
from jax.experimental.pallas import tpu as pltpu

_LANES = 128
_PAIR_LANES = 2 * _LANES        # 256 lanes = 128 interleaved (re, im) pairs per row
_MAX_BLOCK_ROWS = 4096          # 4 MiB f32 per stream per block


def _mod_leaky_relu_kernel(b_ref, x_ref, o_ref, *, scope):
    """One (tm, 256) interleaved block: out = leaky_relu(1 + b/|z|, scope) * x."""
    b = b_ref[0, 0]
    x = x_ref[...].astype(jnp.float32)
    s = x * x
    last = x.ndim - 1                      # pltpu.roll requires a non-negative axis
    w = x.shape[last]
    # Partner square: even lanes (real) need s[i+1], odd lanes (imag) need s[i-1].
    # The rolls ride the otherwise-idle XLU slot; the parity select is cheap VPU work.
    lane = jax.lax.broadcasted_iota(jnp.int32, x.shape, dimension=last)
    partner = jnp.where(
        (lane & 1) == 0,
        pltpu.roll(s, w - 1, axis=last),   # s[i+1]  (shift by -1, expressed positively)
        pltpu.roll(s, 1, axis=last),       # s[i-1]
    )
    absz2 = s + partner                    # |z|^2, identical for both lanes of a pair
    pre = 1.0 + b * jax.lax.rsqrt(absz2)   # == 1 + b / |z|, single EUP push
    scale = jnp.where(pre >= 0.0, pre, scope * pre)  # leaky_relu(pre, scope)
    o_ref[...] = (scale * x).astype(o_ref.dtype)


def _choose_tm(rows: int) -> int:
    """Block rows: as large as possible, but keep >= 2 grid steps for v7x megacore."""
    if rows <= 8:
        return rows                         # single block equal to full extent
    half = pl.cdiv(rows, 2)
    half = ((half + 7) // 8) * 8            # (8, 128) tiling constraint
    return min(_MAX_BLOCK_ROWS, half)


def _run_aligned(x2: jax.Array, b_smem: jax.Array, scope: float) -> jax.Array:
    """Run the kernel on a (rows, 256) contiguous reshape of the input."""
    rows = x2.shape[0]
    dtype = x2.dtype
    tm = _choose_tm(rows)
    grid = (pl.cdiv(rows, tm),)
    tile_spec = pl.BlockSpec((tm, _PAIR_LANES), lambda i: (i, 0))

    n = rows * _PAIR_LANES
    cost = pl.CostEstimate(
        flops=12 * n,
        transcendentals=n,
        bytes_accessed=2 * n * dtype.itemsize,
    )

    return pl.pallas_call(
        functools.partial(_mod_leaky_relu_kernel, scope=float(scope)),
        out_shape=jax.ShapeDtypeStruct((rows, _PAIR_LANES), dtype),
        grid_spec=pltpu.PrefetchScalarGridSpec(
            num_scalar_prefetch=0,
            grid=grid,
            in_specs=[
                pl.BlockSpec(memory_space=pltpu.MemorySpace.SMEM),  # scalar b
                tile_spec,
            ],
            out_specs=tile_spec,
        ),
        compiler_params=pltpu.CompilerParams(
            dimension_semantics=("parallel",),
            vmem_limit_bytes=48 << 20,
        ),
        cost_estimate=cost,
    )(b_smem, x2)


def _tail_jax(tail_x: jax.Array, b: jax.Array, scope: float) -> jax.Array:
    """Pure-JAX epilogue for the <256-element ragged tail (avoids a full pad copy)."""
    t = tail_x.reshape(-1, 2).astype(jnp.float32)
    absz2 = t[:, 0] ** 2 + t[:, 1] ** 2
    pre = 1.0 + jnp.float32(b) * jax.lax.rsqrt(absz2)
    scale = jnp.where(pre >= 0.0, pre, jnp.float32(scope) * pre)[:, None]
    return (scale * t).reshape(-1).astype(tail_x.dtype)


def mod_leaky_relu(x: jax.Array, b: jax.Array, scope: float = 0.1) -> jax.Array:
    """modLeakyReLU forward. `x` has an even number of elements, `b` is scalar."""
    size = x.shape
    n = x.size
    assert n % 2 == 0, "modLeakyReLU requires an even number of elements"

    flat = x.reshape(-1)
    b_smem = jnp.asarray(b, jnp.float32).reshape(1, 1)

    n_aligned = (n // _PAIR_LANES) * _PAIR_LANES
    tail = n - n_aligned

    parts = []
    if n_aligned:
        rows = n_aligned // _PAIR_LANES
        x2 = flat[:n_aligned].reshape(rows, _PAIR_LANES)  # pure reshape, contiguous
        parts.append(_run_aligned(x2, b_smem, scope).reshape(-1))
    if tail:
        parts.append(_tail_jax(flat[n_aligned:], b, scope))

    out = parts[0] if len(parts) == 1 else jnp.concatenate(parts, axis=0)
    return out.reshape(size)


def mod_leaky_relu_reference(x: jax.Array, b: jax.Array, scope: float = 0.1) -> jax.Array:
    """Pure-JAX reference mirroring the PyTorch forward (sqrt + divide)."""
    size = x.shape
    flat = x.reshape(-1, 2).astype(jnp.float32)
    absz = jnp.sqrt(flat[:, 0] ** 2 + flat[:, 1] ** 2)
    pre = 1.0 + jnp.float32(b) / absz
    scale = jnp.where(pre >= 0.0, pre, jnp.float32(scope) * pre)[:, None]
    return (scale * flat).reshape(size).astype(x.dtype)


if __name__ == "__main__":
    key = jax.random.PRNGKey(0)
    k1, k2 = jax.random.split(key)

    # Deterministic parameter init. PyTorch draws b ~ U(-1, 1) (std = 1/sqrt(1));
    # pick a fixed negative value so the leaky branch is exercised.
    b = jnp.float32(-0.25)
    scope = 0.1

    # NCHW activation tensor; complex pairs interleaved along the flattened
    # element order (exactly like the PyTorch reshape(-1, 2)).
    x = jax.random.normal(k1, (2, 4, 16, 16), dtype=jnp.float32)
    out = jax.block_until_ready(mod_leaky_relu(x, b, scope))
    ref = mod_leaky_relu_reference(x, b, scope)
    assert out.shape == x.shape and out.dtype == x.dtype
    assert jnp.allclose(out, ref, atol=1e-5, rtol=1e-5), "mismatch vs reference (aligned)"

    # Ragged case (size % 256 != 0): exercises the aligned kernel + JAX tail path.
    x_ragged = jax.random.normal(k2, (2, 4, 9, 9), dtype=jnp.float32)  # 648 elements
    out_r = jax.block_until_ready(mod_leaky_relu(x_ragged, b, scope))
    ref_r = mod_leaky_relu_reference(x_ragged, b, scope)
    assert out_r.shape == x_ragged.shape and out_r.dtype == x_ragged.dtype
    assert jnp.allclose(out_r, ref_r, atol=1e-5, rtol=1e-5), "mismatch vs reference (ragged)"

    print("KERNEL_OK")
</pallas_src>

<mosaic_0001>
module attributes {stable_mosaic.version = 11 : i64} {
  func.func @_mod_leaky_relu_kernel(%arg0: i32, %arg1: memref<1x1xf32, #tpu.memory_space<smem>>, %arg2: memref<8x256xf32, #tpu.memory_space<vmem>>, %arg3: memref<8x256xf32, #tpu.memory_space<vmem>>) attributes {dimension_semantics = [#tpu.dimension_semantics<parallel>], iteration_bounds = array<i64: 1>, scalar_prefetch = 0 : i64, scratch_operands = 0 : i64, tpu.core_type = #tpu.core_type<tc>, window_params = [{transform_indices = @transform_0, window_bounds = array<i64: 1, 1>}, {transform_indices = @transform_1, window_bounds = array<i64: 8, 256>}, {transform_indices = @transform_2, window_bounds = array<i64: 8, 256>}]} {
    %c0 = arith.constant 0 : index
    %c0_0 = arith.constant 0 : index
    %0 = memref.load %arg1[%c0, %c0_0] : memref<1x1xf32, #tpu.memory_space<smem>>
    %c0_1 = arith.constant 0 : index
    %c0_2 = arith.constant 0 : index
    %1 = vector.load %arg2[%c0_1, %c0_2] : memref<8x256xf32, #tpu.memory_space<vmem>>, vector<8x256xf32>
    %2 = arith.mulf %1, %1 : vector<8x256xf32>
    %3 = tpu.iota {dimensions = array<i32: 1>} : vector<8x256xi32>
    %c1_i32 = arith.constant 1 : i32
    %4 = vector.broadcast %c1_i32 : i32 to vector<8x256xi32>
    %5 = arith.andi %3, %4 : vector<8x256xi32>
    %c0_i32 = arith.constant 0 : i32
    %6 = vector.broadcast %c0_i32 : i32 to vector<8x256xi32>
    %7 = arith.cmpi eq, %5, %6 : vector<8x256xi32>
    %c255_i32 = arith.constant 255 : i32
    %8 = tpu.dynamic_rotate %2 by %c255_i32 dim 1 : vector<8x256xf32>, i32 -> vector<8x256xf32>
    %c1_i32_3 = arith.constant 1 : i32
    %9 = tpu.dynamic_rotate %2 by %c1_i32_3 dim 1 : vector<8x256xf32>, i32 -> vector<8x256xf32>
    %10 = arith.select %7, %8, %9 : vector<8x256xi1>, vector<8x256xf32>
    %11 = arith.addf %2, %10 : vector<8x256xf32>
    %12 = math.rsqrt %11 : vector<8x256xf32>
    %13 = vector.broadcast %0 : f32 to vector<8x256xf32>
    %14 = arith.mulf %13, %12 : vector<8x256xf32>
    %cst = arith.constant 1.000000e+00 : f32
    %15 = vector.broadcast %cst : f32 to vector<8x256xf32>
    %16 = arith.addf %15, %14 : vector<8x256xf32>
    %cst_4 = arith.constant 0.000000e+00 : f32
    %17 = vector.broadcast %cst_4 : f32 to vector<8x256xf32>
    %18 = arith.cmpf oge, %16, %17 : vector<8x256xf32>
    %cst_5 = arith.constant 1.000000e-01 : f32
    %19 = vector.broadcast %cst_5 : f32 to vector<8x256xf32>
    %20 = arith.mulf %19, %16 : vector<8x256xf32>
    %21 = arith.select %18, %16, %20 : vector<8x256xi1>, vector<8x256xf32>
    %22 = arith.mulf %21, %1 : vector<8x256xf32>
    %c0_6 = arith.constant 0 : index
    %c0_7 = arith.constant 0 : index
    %23 = vector.load %arg3[%c0_6, %c0_7] : memref<8x256xf32, #tpu.memory_space<vmem>>, vector<8x256xf32>
    tpu.vector_store %arg3[%c0_6, %c0_7], %22 {strides = array<i32>} : memref<8x256xf32, #tpu.memory_space<vmem>>, vector<8x256xf32>,
    return
  }
  func.func @transform_0(%arg0: i32) -> (i32, i32) {
    %c0_i32 = arith.constant 0 : i32
    %c0_i32_0 = arith.constant 0 : i32
    %c0_i32_1 = arith.constant 0 : i32
    return %c0_i32, %c0_i32_0 : i32, i32
  }
  func.func @transform_1(%arg0: i32) -> (i32, i32) {
    %c0_i32 = arith.constant 0 : i32
    %c0_i32_0 = arith.constant 0 : i32
    return %arg0, %c0_i32 : i32, i32
  }
  func.func @transform_2(%arg0: i32) -> (i32, i32) {
    %c0_i32 = arith.constant 0 : i32
    %c0_i32_0 = arith.constant 0 : i32
    return %arg0, %c0_i32 : i32, i32
  }
}

</mosaic_0001>

<llo_original>
// kernel: tpu_custom_call.1
$region0: #{tpu_custom_call.1}
  #allocation0 [shape = 'u32[]', space=smem, size = 0x4, offset = 0x4, fixed_abs, tag = 'smem constant byte address 0x4 - core index']
  #allocation1 [shape = 'u32[144,128]{1,0:T(1,128)}', space=vmem, size = 0x12000, scoped, tag = 'internal scratch']
  #allocation2 [shape = 'f32[1,1]{1,0:T(1,128)S(6)}', space=smem, size = 0x200, scoped, tag = 'scoped memory for tpu_custom_call.1']
  %s0 = inlined_call_operand.<no memory space> [shape: f32[1,1], index: 0, kind: input, shape index: {}]
  %s1 = inlined_call_operand.hbm [shape: f32[8,256], index: 1, kind: input, shape index: {}]
  %s2 = inlined_call_operand.hbm [shape: f32[8,256], index: 2, kind: output, shape index: {}]
  %s3 = sld [smem:[#allocation0]]
  $region22: #{tpu_custom_call.1} parent=0
    _
  %s5 = ssub.s32 1, %s3
  %s6 = scalar_select 0, %s5, %s3
  %7 = sst [smem:[#allocation2]] %s0
  $region1: #{tpu_custom_call.1} parent=0
    #allocation3 [shape = 'u8[8192]{0}', space=vmem, size = 0x2000, scoped, tag = 'input window, operand 1, single buffered']
    #allocation4 [shape = 's32[1]{0}', space=sflag, size = 0x4, scoped, tag = 'scoped memory for tpu_custom_call.1']
    #allocation5 [shape = 's32[1]{0}', space=sflag, size = 0x4, scoped, tag = 'scoped memory for tpu_custom_call.1']
    #allocation6 [shape = 'u8[8192]{0}', space=vmem, size = 0x2000, scoped, tag = 'output window, operand 0, single buffered']
    %8 = vsyncpa [#allocation4], 0
    %9 = vsyncpa [#allocation5], 0
    // Predicated region
    $region2: #{tpu_custom_call.1} parent=1 // pred_check
      _
    $region3: #{tpu_custom_call.1} parent=1 // pred_check_branch
      %11 = sbr.rel (0) target = $region5
    $region4: #{tpu_custom_call.1} parent=1 // pred_region
      _
    $region5: #{tpu_custom_call.1} parent=1 // pred_fallthru
      _
    // Predicated region
    $region6: #{tpu_custom_call.1} parent=1 // pred_check
      _
    $region7: #{tpu_custom_call.1} parent=1 // pred_check_branch
      %13 = sbr.rel (0) target = $region9
    $region8: #{tpu_custom_call.1} parent=1 // pred_region
      %s15 = ssub.s32 256, 256
      %16 = vsyncadd [#allocation4], %s15
      %s18 = sshll.u32 [#allocation3], 4
      %s19 = int_to_ptr.vmem [resolvable:$true] %s18
      %21 = dma.hbm_to_vmem [thread:$0]  %s1, 256, %s19, [#allocation4]
    $region9: #{tpu_custom_call.1} parent=1 // pred_fallthru
      _
    // Predicated region
    $region10: #{tpu_custom_call.1} parent=1 // pred_check
      _
    $region11: #{tpu_custom_call.1} parent=1 // pred_check_branch
      %23 = sbr.rel (0) target = $region13
    $region12: #{tpu_custom_call.1} parent=1 // pred_region
      %24 = dma.done [#allocation4], 256
    $region13: #{tpu_custom_call.1} parent=1 // pred_fallthru
      _
    %s25 = sld [smem:[#allocation2]]
    %v26 = vld [vmem:[#allocation3] sm:$0xff]
    %v27 = vld [vmem:[#allocation3 + $0x8] sm:$0xff]
    %v28 = vmul.f32 %v26, %v26
    %v29 = vmul.f32 %v27, %v27
    %v30 = vlaneseq
    %v31 = vand.u32 %v30, 127
    %v32 = vadd.s32 %v31, 128
    %v33 = vand.u32 %v31, 1
    %v34 = vand.u32 %v32, 1
    %vm35 = vcmp.eq.s32.totalorder %v33, 0
    %vm36 = vcmp.eq.s32.totalorder %v34, 0
    %37 = vrot.lane.b32.xlu0 %v28, 127
    %v38 = vpop.permute.xlu0 %37
    %39 = vrot.lane.b32.xlu0 %v29, 127
    %v40 = vpop.permute.xlu0 %39
    %vm41 = vcmp.lt.s32.totalorder %v31, 127
    %v42 = vsel %vm41, %v38, %v40
    %v43 = vsel %vm41, %v40, %v38
    %44 = vrot.lane.b32.xlu0 %v28, 1
    %v45 = vpop.permute.xlu0 %44
    %46 = vrot.lane.b32.xlu0 %v29, 1
    %v47 = vpop.permute.xlu0 %46
    %vm48 = vcmp.lt.s32.totalorder %v31, 1
    %v49 = vsel %vm48, %v45, %v47
    %v50 = vsel %vm48, %v47, %v45
    %v51 = vsel %vm35, %v42, %v50
    %v52 = vsel %vm36, %v43, %v49
    %v53 = vadd.f32 %v28, %v51
    %v54 = vadd.f32 %v29, %v52
    %v55 = vrsqrt.pop %v53
    %v56 = vrsqrt.pop %v54
    %v57 = vstv %s25
    %v58 = vmul.f32 %v57, %v55
    %v59 = vmul.f32 %v57, %v56
    %v60 = vadd.f32 %v58, 1.0
    %v61 = vadd.f32 %v59, 1.0
    %vm62 = vcmp.ge.f32.partialorder %v60, 0.0
    %vm63 = vcmp.ge.f32.partialorder %v61, 0.0
    %v64 = vmul.f32 %v60, 0.1
    %v65 = vmul.f32 %v61, 0.1
    %v66 = vsel %vm62, %v60, %v64
    %v67 = vsel %vm63, %v61, %v65
    %v68 = vmul.f32 %v66, %v26
    %v69 = vmul.f32 %v67, %v27
    %70 = vst [vmem:[#allocation6] sm:$0xff] %v68
    %71 = vst [vmem:[#allocation6 + $0x8] sm:$0xff] %v69
    // Predicated region
    $region14: #{tpu_custom_call.1} parent=1 // pred_check
      _
    $region15: #{tpu_custom_call.1} parent=1 // pred_check_branch
      %73 = sbr.rel (0) target = $region17
    $region16: #{tpu_custom_call.1} parent=1 // pred_region
      %s75 = ssub.s32 256, 256
      %76 = vsyncadd [#allocation5], %s75
      %s78 = sshll.u32 [#allocation6], 4
      %s79 = int_to_ptr.vmem [resolvable:$true] %s78
      %81 = dma.vmem_to_hbm [thread:$0]  %s79, 256, %s2, [#allocation5]
    $region17: #{tpu_custom_call.1} parent=1 // pred_fallthru
      _
    // Predicated region
    $region18: #{tpu_custom_call.1} parent=1 // pred_check
      _
    $region19: #{tpu_custom_call.1} parent=1 // pred_check_branch
      %83 = sbr.rel (0) target = $region21
    $region20: #{tpu_custom_call.1} parent=1 // pred_region
      %84 = dma.done [#allocation5], 256
    $region21: #{tpu_custom_call.1} parent=1 // pred_fallthru
      _
    %85 = vsyncpa [#allocation4], 1
    %86 = vsyncpa [#allocation5], 1

</llo_original>
